<compile_context>
chip_gen: v6e
topology: v6e:2x2x1
jax: 0.10.0
libtpu: 0.0.40
codegen_flags: <defaults>
</compile_context>

<pallas_src>
import jax
import jax.numpy as jnp
from jax.experimental import pallas as pl
from jax.experimental.pallas import tpu as pltpu


# ---------------------------------------------------------------------------
# Kernels
# ---------------------------------------------------------------------------

def _qlinear_kernel_single_k(x_ref, w_ref, b_ref, o_ref):
    # Whole-K contraction in one MXU pass: no accumulator scratch, no
    # zero-init / epilogue passes over the (tm, tn) f32 tile.
    o_ref[...] = (
        jnp.dot(x_ref[...], w_ref[...], preferred_element_type=jnp.float32)
        + b_ref[...].astype(jnp.float32)
    ).astype(o_ref.dtype)


def _qlinear_kernel_multi_k(x_ref, w_ref, b_ref, o_ref, acc_ref):
    # K-innermost reduction with an f32 accumulator persisting across the K
    # grid axis; bias add + downcast happen once, in the epilogue.
    k = pl.program_id(2)

    @pl.when(k == 0)
    def _():
        acc_ref[...] = jnp.zeros_like(acc_ref)

    acc_ref[...] += jnp.dot(
        x_ref[...], w_ref[...], preferred_element_type=jnp.float32
    )

    @pl.when(k == pl.num_programs(2) - 1)
    def _():
        o_ref[...] = (
            acc_ref[...] + b_ref[...].astype(jnp.float32)
        ).astype(o_ref.dtype)


# ---------------------------------------------------------------------------
# Tiling helpers
# ---------------------------------------------------------------------------

def _round_up(x, m):
    return (x + m - 1) // m * m


def _pick_divisor(dim, candidates):
    """Largest candidate that divides `dim`, else the full dim (single block)."""
    for c in candidates:
        if c <= dim and dim % c == 0:
            return c
    return dim


def _pick_row_tile(m8, candidates):
    """Largest candidate whose zero-padding stays <= 12.5% of the rows."""
    for c in candidates:
        if c > m8:
            continue
        pad = _round_up(m8, c) - m8
        if pad * 8 <= m8:
            return c
    return m8


def _physical_vmem_bytes():
    try:
        return int(pltpu.get_tpu_info().vmem_capacity_bytes)
    except Exception:
        return 64 * 1024 * 1024  # conservative default (v7x per-core VMEM)


# ---------------------------------------------------------------------------
# Parameter prep (do this ONCE at load time, not per forward call)
# ---------------------------------------------------------------------------

def prepare_query_params(weight_pt, bias, compute_dtype=jnp.bfloat16):
    """PyTorch Linear weight is (out_features, in_features).

    Returns (weight_t, bias2d) with the weight pre-transposed to
    (in_features, out_features) and pre-cast to `compute_dtype`, and the bias
    as a (1, out_features) f32 row.  Doing the cast here removes a full
    K*N f32 HBM read + bf16 write from every forward pass.
    """
    w_t = jnp.asarray(weight_pt).T
    if compute_dtype is not None:
        w_t = w_t.astype(compute_dtype)
    b2d = jnp.asarray(bias).reshape(1, -1).astype(jnp.float32)
    return w_t, b2d


# ---------------------------------------------------------------------------
# Forward
# ---------------------------------------------------------------------------

def query_layer_forward(x, weight_t, bias, *, compute_dtype=jnp.bfloat16):
    """y = x @ weight_t + bias  (PyTorch nn.Linear on the last axis).

    x        : (B, S, d_model)
    weight_t : (d_model, d_model * n_heads)  -- ideally pre-cast bf16
    bias     : (d_model * n_heads,) or (1, d_model * n_heads)
    returns  : (B, S, d_model * n_heads), in x.dtype
    """
    B, S, K = x.shape
    Kw, N = weight_t.shape
    assert Kw == K
    M = B * S
    out_dtype = x.dtype

    if compute_dtype is None:
        compute_dtype = x.dtype
    in_bytes = jnp.dtype(compute_dtype).itemsize
    out_bytes = jnp.dtype(out_dtype).itemsize

    # ---- per-chip VMEM budget ----------------------------------------------
    vmem_phys = _physical_vmem_bytes()
    if vmem_phys >= 96 * 1024 * 1024:          # v5e / v6e: 128 MiB physical
        vmem_target = 100 * 1024 * 1024
        big_vmem = True
    else:                                      # v7x: 64 MiB physical
        vmem_target = (vmem_phys * 3) // 4     # ~48 MiB
        big_vmem = False

    # ---- tile selection (8/128-aligned, 256-preferred, VMEM-conscious) -----
    M8 = _round_up(M, 8)
    tm_cands = (1024, 512, 256, 128, 64, 32, 16, 8) if big_vmem else \
               (512, 256, 128, 64, 32, 16, 8)
    tm = _pick_row_tile(M8, tm_cands)
    Mp = _round_up(M8, tm)

    tn_cands = (4096, 2048, 1024, 512, 256, 128) if big_vmem else \
               (2048, 1024, 512, 256, 128)
    tn = _pick_divisor(N, tn_cands)

    # Keep the full-K weight strip resident when the double-buffered slab fits;
    # shrink tn (still dividing N) to make it fit before falling back to a
    # split-K accumulator.
    weight_budget = vmem_target // 2
    while (2 * K * tn * in_bytes > weight_budget
           and tn % 256 == 0 and tn > 256):
        tn //= 2
    if 2 * K * tn * in_bytes <= weight_budget:
        tk = K
    else:
        tk = _pick_divisor(K, (2048, 1024, 512, 256, 128))

    ni = Mp // tm
    nj = N // tn
    single_k = (tk == K)

    # ---- prepare operands (cast first, pad in compute_dtype) ---------------
    x2d = x.reshape(M, K).astype(compute_dtype)
    if Mp > M:
        x2d = jnp.pad(x2d, ((0, Mp - M), (0, 0)))
    # Weight should already be compute_dtype (prepare_query_params); this is a
    # fallback so correctness never depends on the caller.
    w = weight_t if weight_t.dtype == compute_dtype else weight_t.astype(compute_dtype)
    bias2d = jnp.asarray(bias).reshape(1, N).astype(jnp.float32)

    # ---- VMEM estimate / limit ----------------------------------------------
    vmem_est = (
        2 * tm * tk * in_bytes        # x tiles (double-buffered)
        + 2 * tk * tn * in_bytes      # weight tiles
        + 2 * tn * 4                  # bias tile (f32)
        + 2 * tm * tn * out_bytes     # output tiles
        + (0 if single_k else tm * tn * 4)  # f32 accumulator (multi-K only)
    )
    vmem_limit = int(min(max(2 * vmem_est, 32 * 1024 * 1024), vmem_target))

    cost = pl.CostEstimate(
        flops=2 * M * K * N,
        transcendentals=0,
        bytes_accessed=int(Mp * K * in_bytes + K * N * in_bytes
                           + Mp * N * out_bytes + N * 4),
    )

    # ---- grid construction (megacore-balanced ordering) --------------------
    # Lead with the N-tile axis (weight streamed once) unless it has extent 1
    # while the M-tile axis doesn't: then lead with M so v7x's two TensorCores
    # both get work.
    n_leading = (nj >= 2) or (ni == 1)

    if single_k:
        kernel = _qlinear_kernel_single_k
        scratch = ()
        if n_leading:
            grid = (nj, ni)
            x_map = lambda j, i: (i, 0)
            w_map = lambda j, i: (0, j)
            b_map = lambda j, i: (0, j)
            o_map = lambda j, i: (i, j)
        else:
            grid = (ni, nj)
            x_map = lambda i, j: (i, 0)
            w_map = lambda i, j: (0, j)
            b_map = lambda i, j: (0, j)
            o_map = lambda i, j: (i, j)
        dim_sem = ("parallel", "parallel")
    else:
        kernel = _qlinear_kernel_multi_k
        scratch = (pltpu.VMEM((tm, tn), jnp.float32),)
        nk = K // tk
        if n_leading:
            grid = (nj, ni, nk)
            x_map = lambda j, i, k: (i, k)
            w_map = lambda j, i, k: (k, j)
            b_map = lambda j, i, k: (0, j)
            o_map = lambda j, i, k: (i, j)
        else:
            grid = (ni, nj, nk)
            x_map = lambda i, j, k: (i, k)
            w_map = lambda i, j, k: (k, j)
            b_map = lambda i, j, k: (0, j)
            o_map = lambda i, j, k: (i, j)
        dim_sem = ("parallel", "parallel", "arbitrary")

    out2d = pl.pallas_call(
        kernel,
        out_shape=jax.ShapeDtypeStruct((Mp, N), out_dtype),
        grid_spec=pltpu.PrefetchScalarGridSpec(
            num_scalar_prefetch=0,
            grid=grid,
            in_specs=[
                pl.BlockSpec((tm, tk), x_map),   # activations
                pl.BlockSpec((tk, tn), w_map),   # weight (resident across M)
                pl.BlockSpec((1, tn), b_map),    # bias lane-tile
            ],
            out_specs=pl.BlockSpec((tm, tn), o_map),
            scratch_shapes=scratch,
        ),
        compiler_params=pltpu.CompilerParams(
            dimension_semantics=dim_sem,
            vmem_limit_bytes=vmem_limit,
        ),
        cost_estimate=cost,
    )(x2d, w, bias2d)

    if Mp > M:
        out2d = out2d[:M]
    return out2d.reshape(B, S, N)


# ---------------------------------------------------------------------------
# Self-test
# ---------------------------------------------------------------------------

if __name__ == "__main__":
    # Small shapes consistent with the module's forward.
    B, S = 2, 8
    d_model, n_heads = 32, 4
    out_features = d_model * n_heads  # 128

    key = jax.random.PRNGKey(0)
    k_x, k_w, k_b = jax.random.split(key, 3)

    x = jax.random.normal(k_x, (B, S, d_model), dtype=jnp.float32)

    # PyTorch Linear weight is (out_features, in_features).
    bound = 1.0 / (d_model ** 0.5)
    w_pt = jax.random.uniform(
        k_w, (out_features, d_model), minval=-bound, maxval=bound,
        dtype=jnp.float32)
    b = jax.random.uniform(
        k_b, (out_features,), minval=-bound, maxval=bound, dtype=jnp.float32)

    # One-time parameter prep: transpose + bf16 cast happens here, not per call.
    w_t, b2d = prepare_query_params(w_pt, b, compute_dtype=jnp.bfloat16)

    y = query_layer_forward(x, w_t, b2d)
    jax.block_until_ready(y)

    # Reference (plain JAX) with the same bf16-input / f32-accumulate recipe
    # the kernel uses, so the comparison is apples-to-apples.
    x_q = x.astype(jnp.bfloat16).astype(jnp.float32)
    w_q = w_pt.T.astype(jnp.bfloat16).astype(jnp.float32)
    y_ref = x_q.reshape(-1, d_model) @ w_q + b
    y_ref = y_ref.reshape(B, S, out_features)

    assert y.shape == (B, S, out_features)
    assert y.dtype == x.dtype
    assert jnp.allclose(y, y_ref, atol=1e-4, rtol=1e-4)

    print("KERNEL_OK")
</pallas_src>

<mosaic_0001>
module attributes {stable_mosaic.version = 11 : i64} {
  func.func @_qlinear_kernel_single_k(%arg0: i32, %arg1: i32, %arg2: memref<16x32xbf16, #tpu.memory_space<vmem>>, %arg3: memref<32x128xbf16, #tpu.memory_space<vmem>>, %arg4: memref<1x128xf32, #tpu.memory_space<vmem>>, %arg5: memref<16x128xf32, #tpu.memory_space<vmem>>) attributes {dimension_semantics = [#tpu.dimension_semantics<parallel>, #tpu.dimension_semantics<parallel>], iteration_bounds = array<i64: 1, 1>, scalar_prefetch = 0 : i64, scratch_operands = 0 : i64, tpu.core_type = #tpu.core_type<tc>, window_params = [{transform_indices = @transform_0, window_bounds = array<i64: 16, 32>}, {transform_indices = @transform_1, window_bounds = array<i64: 32, 128>}, {transform_indices = @transform_2, window_bounds = array<i64: 1, 128>}, {transform_indices = @transform_3, window_bounds = array<i64: 16, 128>}]} {
    %c0 = arith.constant 0 : index
    %c0_0 = arith.constant 0 : index
    %0 = vector.load %arg2[%c0, %c0_0] : memref<16x32xbf16, #tpu.memory_space<vmem>>, vector<16x32xbf16>
    %c0_1 = arith.constant 0 : index
    %c0_2 = arith.constant 0 : index
    %1 = vector.load %arg3[%c0_1, %c0_2] : memref<32x128xbf16, #tpu.memory_space<vmem>>, vector<32x128xbf16>
    %cst = arith.constant dense<0.000000e+00> : vector<16x128xf32>
    %2 = tpu.matmul %0, %1, %cst {dimension_numbers = #tpu.dot_dimension_numbers<[1], [0], [0], [1], [0, 0, 1, 1], [], []>} : vector<16x32xbf16>, vector<32x128xbf16>, vector<16x128xf32> -> vector<16x128xf32>
    %c0_3 = arith.constant 0 : index
    %c0_4 = arith.constant 0 : index
    %3 = vector.load %arg4[%c0_3, %c0_4] : memref<1x128xf32, #tpu.memory_space<vmem>>, vector<1x128xf32>
    %4 = vector.broadcast %3 : vector<1x128xf32> to vector<16x128xf32>
    %5 = arith.addf %2, %4 : vector<16x128xf32>
    %c0_5 = arith.constant 0 : index
    %c0_6 = arith.constant 0 : index
    %6 = vector.load %arg5[%c0_5, %c0_6] : memref<16x128xf32, #tpu.memory_space<vmem>>, vector<16x128xf32>
    tpu.vector_store %arg5[%c0_5, %c0_6], %5 {strides = array<i32>} : memref<16x128xf32, #tpu.memory_space<vmem>>, vector<16x128xf32>,
    return
  }
  func.func @transform_0(%arg0: i32, %arg1: i32) -> (i32, i32) {
    %c0_i32 = arith.constant 0 : i32
    %c0_i32_0 = arith.constant 0 : i32
    return %arg1, %c0_i32 : i32, i32
  }
  func.func @transform_1(%arg0: i32, %arg1: i32) -> (i32, i32) {
    %c0_i32 = arith.constant 0 : i32
    %c0_i32_0 = arith.constant 0 : i32
    return %c0_i32, %arg0 : i32, i32
  }
  func.func @transform_2(%arg0: i32, %arg1: i32) -> (i32, i32) {
    %c0_i32 = arith.constant 0 : i32
    %c0_i32_0 = arith.constant 0 : i32
    return %c0_i32, %arg0 : i32, i32
  }
  func.func @transform_3(%arg0: i32, %arg1: i32) -> (i32, i32) {
    %c0_i32 = arith.constant 0 : i32
    return %arg1, %arg0 : i32, i32
  }
}

</mosaic_0001>

<llo_original>
// kernel: tpu_custom_call.1
$region0: #{tpu_custom_call.1}
  #allocation0 [shape = 'u32[]', space=smem, size = 0x4, offset = 0x4, fixed_abs, tag = 'smem constant byte address 0x4 - core index']
  #allocation1 [shape = 'u32[144,128]{1,0:T(1,128)}', space=vmem, size = 0x12000, scoped, tag = 'internal scratch']
  %s0 = inlined_call_operand.hbm [shape: bf16[16,32], index: 0, kind: input, shape index: {}]
  %s1 = inlined_call_operand.hbm [shape: bf16[32,128], index: 1, kind: input, shape index: {}]
  %s2 = inlined_call_operand.vmem [shape: f32[1,128], index: 2, kind: input, shape index: {}]
  %s3 = inlined_call_operand.hbm [shape: f32[16,128], index: 3, kind: output, shape index: {}]
  %s4 = sld [smem:[#allocation0]]
  $region30: #{tpu_custom_call.1} parent=0
    _
  %s6 = ssub.s32 1, %s4
  %s7 = scalar_select 0, %s6, %s4
  $region1: #{tpu_custom_call.1} parent=0
    #allocation2 [shape = 'u8[4096]{0}', space=vmem, size = 0x1000, scoped, tag = 'input window, operand 0, single buffered']
    #allocation3 [shape = 's32[1]{0}', space=sflag, size = 0x4, scoped, tag = 'scoped memory for tpu_custom_call.1']
    #allocation4 [shape = 's32[1]{0}', space=sflag, size = 0x4, scoped, tag = 'scoped memory for tpu_custom_call.1']
    #allocation5 [shape = 'u8[8192]{0}', space=vmem, size = 0x2000, scoped, tag = 'input window, operand 1, single buffered']
    #allocation6 [shape = 's32[1]{0}', space=sflag, size = 0x4, scoped, tag = 'scoped memory for tpu_custom_call.1']
    #allocation7 [shape = 'u8[8192]{0}', space=vmem, size = 0x2000, scoped, tag = 'output window, operand 0, single buffered']
    %8 = vsyncpa [#allocation3], 0
    %9 = vsyncpa [#allocation6], 0
    %10 = vsyncpa [#allocation4], 0
    // Predicated region
    $region2: #{tpu_custom_call.1} parent=1 // pred_check
      _
    $region3: #{tpu_custom_call.1} parent=1 // pred_check_branch
      %12 = sbr.rel (0) target = $region5
    $region4: #{tpu_custom_call.1} parent=1 // pred_region
      %s14 = ssub.s32 128, 128
      %15 = vsyncadd [#allocation3], %s14
      %s16 = sshll.u32 [#allocation2], 4
      %s17 = int_to_ptr.vmem [resolvable:$true] %s16
      %22 = dma.hbm_to_vmem [thread:$0]  %s0, 128, %s17, [#allocation3], 64, 64, 4
    $region5: #{tpu_custom_call.1} parent=1 // pred_fallthru
      _
    // Predicated region
    $region6: #{tpu_custom_call.1} parent=1 // pred_check
      _
    $region7: #{tpu_custom_call.1} parent=1 // pred_check_branch
      %24 = sbr.rel (0) target = $region9
    $region8: #{tpu_custom_call.1} parent=1 // pred_region
      %s26 = ssub.s32 256, 256
      %27 = vsyncadd [#allocation6], %s26
      %s28 = sshll.u32 [#allocation5], 4
      %s29 = int_to_ptr.vmem [resolvable:$true] %s28
      %34 = dma.hbm_to_vmem [thread:$0]  %s1, 256, %s29, [#allocation6], 64, 64, 4
    $region9: #{tpu_custom_call.1} parent=1 // pred_fallthru
      _
    // Predicated region
    $region10: #{tpu_custom_call.1} parent=1 // pred_check
      _
    $region11: #{tpu_custom_call.1} parent=1 // pred_check_branch
      %36 = sbr.rel (0) target = $region13
    $region12: #{tpu_custom_call.1} parent=1 // pred_region
      _
    $region13: #{tpu_custom_call.1} parent=1 // pred_fallthru
      _
    // Predicated region
    $region14: #{tpu_custom_call.1} parent=1 // pred_check
      _
    $region15: #{tpu_custom_call.1} parent=1 // pred_check_branch
      %38 = sbr.rel (0) target = $region17
    $region16: #{tpu_custom_call.1} parent=1 // pred_region
      %39 = dma.done [#allocation3], 128
    $region17: #{tpu_custom_call.1} parent=1 // pred_fallthru
      _
    // Predicated region
    $region18: #{tpu_custom_call.1} parent=1 // pred_check
      _
    $region19: #{tpu_custom_call.1} parent=1 // pred_check_branch
      %41 = sbr.rel (0) target = $region21
    $region20: #{tpu_custom_call.1} parent=1 // pred_region
      %42 = dma.done [#allocation6], 256
    $region21: #{tpu_custom_call.1} parent=1 // pred_fallthru
      _
    %v44 = vld [vmem:[#allocation2] sm:$0xf]
    %v45 = vld [vmem:[#allocation2 + $0x4] sm:$0xf]
    %v46 = vld [vmem:[#allocation5] sm:$0xf]
    %v47 = vld [vmem:[#allocation5 + $0x4] sm:$0xf]
    %v48 = vld [vmem:[#allocation5 + $0x8] sm:$0xf]
    %v49 = vld [vmem:[#allocation5 + $0xc] sm:$0xf]
    %v50 = vld [vmem:[%s2] sm:$0x1]
    %v52 = vlaneseq
    %v53 = vshrl.u32 %v52, 7
    %v54 = vsub.s32 0, %v53
    %v55 = vrot.slane %v50, %v54
    %v59 = vunpack.c.l.b16 %v44
    %v60 = vunpack.c.l.b16 %v45
    %v61 = vpack.c.b16 %v60, %v59
    %v66 = vunpack.c.l.b16 %v46
    %v67 = vunpack.c.l.b16 %v47
    %v68 = vunpack.c.l.b16 %v48
    %v69 = vunpack.c.l.b16 %v49
    %v70 = vpack.c.b16 %v67, %v66
    %v71 = vpack.c.b16 %v69, %v68
    %vm74 = vcmask 261120
    %v76 = vsel %vm74, %v61, 0
    %78 = vmatprep.subr.bf16.mxu0 0
    %79 = vmatpush1.bf16.msra.mxu0 0
    %80 = vmatprep.subr.bf16.mxu0 0
    %81 = vmatpush1.bf16.msra.mxu0 0
    %82 = vmatprep.subr.bf16.mxu0 0
    %83 = vmatpush1.bf16.msra.mxu0 0
    %84 = vmatprep.subr.bf16.mxu0 0
    %85 = vmatpush1.bf16.msra.mxu0 0
    %86 = vmatprep.subr.bf16.mxu0 0
    %87 = vmatpush1.bf16.msra.mxu0 0
    %88 = vmatprep.subr.bf16.mxu0 0
    %89 = vmatpush1.bf16.msra.mxu0 0
    %90 = vmatprep.subr.bf16.mxu0 0
    %91 = vmatpush1.bf16.msra.mxu0 %v71
    %92 = vmatprep.subr.bf16.mxu0 0
    %93 = vmatpush1.bf16.msra.mxu0 %v70
    %94 = vmatprep.subr.bf16.mxu0 0
    %95 = vmatpush2.bf16.msra.mxu0 0
    %96 = vmatprep.subr.bf16.mxu0 0
    %97 = vmatpush2.bf16.msra.mxu0 0
    %98 = vmatprep.subr.bf16.mxu0 0
    %99 = vmatpush2.bf16.msra.mxu0 0
    %100 = vmatprep.subr.bf16.mxu0 0
    %101 = vmatpush2.bf16.msra.mxu0 0
    %102 = vmatprep.subr.bf16.mxu0 0
    %103 = vmatpush2.bf16.msra.mxu0 0
    %104 = vmatprep.subr.bf16.mxu0 0
    %105 = vmatpush2.bf16.msra.mxu0 0
    %106 = vmatprep.subr.bf16.mxu0 0
    %107 = vmatpush2.bf16.msra.mxu0 0
    %108 = vmatprep.subr.bf16.mxu0 0
    %109 = vmatpush2.bf16.msra.mxu0 0
    %110 = vmatprep.mubr.bf16.mxu0 0
    %111 = vmatmul.mubr.bf16.gmra.mxu0 %v76
    %v112 = vpop.f32.mrf.mxu0
    %v113 = vadd.f32 %v55, %v112
    %v114 = vpop.f32.mrf.mxu0
    %v115 = vpop.f32.mrf.mxu0
    %v116 = vadd.f32 %v55, %v115
    %v117 = vpop.f32.mrf.mxu0
    %118 = vdwg.mxu0
    %119 = vst [vmem:[#allocation7] sm:$0xff] %v113
    %120 = vst [vmem:[#allocation7 + $0x8] sm:$0xff] %v116
    // Predicated region
    $region22: #{tpu_custom_call.1} parent=1 // pred_check
      _
    $region23: #{tpu_custom_call.1} parent=1 // pred_check_branch
      %122 = sbr.rel (0) target = $region25
    $region24: #{tpu_custom_call.1} parent=1 // pred_region
      %s124 = ssub.s32 256, 256
      %125 = vsyncadd [#allocation4], %s124
      %s126 = sshll.u32 [#allocation7], 4
      %s127 = int_to_ptr.vmem [resolvable:$true] %s126
      %132 = dma.vmem_to_hbm [thread:$0]  %s127, 256, %s3, [#allocation4], 128, 128, 8
    $region25: #{tpu_custom_call.1} parent=1 // pred_fallthru
      _
    // Predicated region
    $region26: #{tpu_custom_call.1} parent=1 // pred_check
      _
    $region27: #{tpu_custom_call.1} parent=1 // pred_check_branch
      %134 = sbr.rel (0) target = $region29
    $region28: #{tpu_custom_call.1} parent=1 // pred_region
      %135 = dma.done [#allocation4], 256
    $region29: #{tpu_custom_call.1} parent=1 // pred_fallthru
      _
    %136 = vsyncpa [#allocation3], 1
    %137 = vsyncpa [#allocation6], 1
    %138 = vsyncpa [#allocation4], 1

</llo_original>
